<compile_context>
chip_gen: v7x
topology: tpu7x:2x2x1
jax: 0.10.0
libtpu: 0.0.40
codegen_flags: <defaults>
</compile_context>

<pallas_src>
import jax
import jax.numpy as jnp
from jax.experimental import pallas as pl
from jax.experimental.pallas import tpu as pltpu


# ----------------------------- Pallas kernel ------------------------------ #
def mlp_kernel(x_ref, w1_ref, b1_ref, w2T_ref, b2_ref, oT_ref):
    # First layer in the input's natural (batch-major) layout:
    #   h = ReLU(x @ W1 + b1)                     -> (tile_b, hidden), f32 acc
    h = jnp.dot(x_ref[...], w1_ref[...], preferred_element_type=jnp.float32)
    h = jnp.maximum(h + b1_ref[...], 0.0)              # bias + ReLU in f32 (VPU)
    # Second layer emits the transposed (feature-major) output so the batch
    # dim lands on TPU lanes -> lane-dense, unmasked stores:
    #   y^T = W2p^T @ h^T  (contract the hidden dim of both operands)
    yT = jax.lax.dot_general(
        w2T_ref[...], h.astype(w2T_ref.dtype),
        dimension_numbers=(((1,), (1,)), ((), ())),
        preferred_element_type=jnp.float32)             # (out_pad, tile_b)
    oT_ref[...] = (yT + b2_ref[...]).astype(oT_ref.dtype)


# ------------------------------- wrapper ----------------------------------- #
def neural_net_forward(x, w1, b1, w2, b2, *, tile_b=None,
                       stream_dtype=jnp.bfloat16):
    """Forward pass of the 2-layer MLP inside a single batched Pallas kernel.

    x:  (batch, in_dim)   w1: (in_dim, hidden)   b1: (hidden,) or (1, hidden)
    w2: (hidden, out_dim) b2: (out_dim,) or (1, out_dim)
    Returns (batch, out_dim) float32.
    """
    batch, in_dim = x.shape
    hidden = w1.shape[1]
    out_dim = w2.shape[1]
    out_pad = max(8, ((out_dim + 7) // 8) * 8)     # full 8-sublane output rows

    # Tiling: half the (128-aligned) batch per step so the "parallel" grid
    # axis shards across v7x's two TensorCores; large tiles amortize the
    # ~0.35 us per-step overhead on v5e/v6e; cap keeps double-buffered
    # blocks far inside scoped VMEM on every generation.
    if tile_b is None:
        b128 = pl.cdiv(max(batch, 1), 128) * 128
        tile_b = min(max(pl.cdiv(b128, 2 * 128) * 128, 128), 16384)
    n_tiles = pl.cdiv(batch, tile_b)
    batch_pad = n_tiles * tile_b

    # Cast streamed/resident matmul operands (halves the dominant x HBM
    # stream on v6e/v7x; still a DMA win on v5e).  Biases stay f32.
    xs = x.astype(stream_dtype)                               # (batch, in_dim)
    w1s = w1.astype(stream_dtype)                             # (in_dim, hidden)
    w2T = jnp.zeros((out_pad, hidden), stream_dtype)          # sublane-padded
    w2T = w2T.at[:out_dim].set(w2.T.astype(stream_dtype))     # (out_pad, hidden)
    b1c = jnp.reshape(b1, (1, hidden)).astype(jnp.float32)
    b2c = jnp.zeros((out_pad, 1), jnp.float32)
    b2c = b2c.at[:out_dim, 0].set(jnp.reshape(b2, (-1,)).astype(jnp.float32))

    s_bytes = jnp.dtype(stream_dtype).itemsize
    flops = 2 * batch_pad * (in_dim * hidden + hidden * out_pad)
    bytes_accessed = int(
        batch_pad * in_dim * s_bytes                 # streamed x blocks
        + batch_pad * out_pad * 4                    # streamed f32 y^T blocks
        + (in_dim * hidden + out_pad * hidden) * s_bytes   # resident weights
        + (hidden + out_pad) * 4)                    # resident f32 biases

    yT = pl.pallas_call(
        mlp_kernel,
        out_shape=jax.ShapeDtypeStruct((out_pad, batch_pad), jnp.float32),
        grid=(n_tiles,),
        in_specs=[
            pl.BlockSpec((tile_b, in_dim), lambda i: (i, 0)),    # streamed x
            pl.BlockSpec((in_dim, hidden), lambda i: (0, 0)),    # resident W1
            pl.BlockSpec((1, hidden), lambda i: (0, 0)),         # resident b1
            pl.BlockSpec((out_pad, hidden), lambda i: (0, 0)),   # resident W2^T
            pl.BlockSpec((out_pad, 1), lambda i: (0, 0)),        # resident b2
        ],
        out_specs=pl.BlockSpec((out_pad, tile_b), lambda i: (0, i)),
        compiler_params=pltpu.CompilerParams(
            dimension_semantics=("parallel",)),
        cost_estimate=pl.CostEstimate(
            flops=flops, transcendentals=0, bytes_accessed=bytes_accessed),
    )(xs, w1s, b1c, w2T, b2c)

    # Drop the sublane/batch padding and go back to (batch, out_dim).
    return yT[:out_dim, :batch].T


# ------------------------- pure-JAX reference ------------------------------ #
def neural_net_reference(x, w1, b1, w2, b2, compute_dtype=jnp.float32):
    """Mirrors the kernel math (same dtypes, f32 accumulation)."""
    xc = x.astype(compute_dtype)
    w1c = w1.astype(compute_dtype)
    w2c = w2.astype(compute_dtype)
    h = jnp.dot(xc, w1c, preferred_element_type=jnp.float32)
    h = jnp.maximum(h + jnp.reshape(b1, (-1,)).astype(jnp.float32), 0.0)
    y = jnp.dot(h.astype(compute_dtype), w2c, preferred_element_type=jnp.float32)
    return y + jnp.reshape(b2, (-1,)).astype(jnp.float32)


# --------------------------------- main ------------------------------------ #
if __name__ == "__main__":
    key = jax.random.PRNGKey(0)
    k_x, k_w1, k_b1, k_w2, k_b2 = jax.random.split(key, 5)

    batch, in_dim, hidden, out_dim = 512, 16, 32, 4   # auto-tiling: 2 x 256 tiles

    x = jax.random.normal(k_x, (batch, in_dim), dtype=jnp.float32)
    # Deterministic synthetic parameters (original module has no weights).
    w1 = jax.random.normal(k_w1, (in_dim, hidden), dtype=jnp.float32) * 0.1
    b1 = jax.random.normal(k_b1, (hidden,), dtype=jnp.float32) * 0.01
    w2 = jax.random.normal(k_w2, (hidden, out_dim), dtype=jnp.float32) * 0.1
    b2 = jax.random.normal(k_b2, (out_dim,), dtype=jnp.float32) * 0.01

    out = neural_net_forward(x, w1, b1, w2, b2)       # bf16 stream, f32 accum
    out = jax.block_until_ready(out)

    ref = neural_net_reference(x, w1, b1, w2, b2, compute_dtype=jnp.bfloat16)
    assert out.shape == (batch, out_dim)
    max_err = float(jnp.max(jnp.abs(out - ref)))
    assert jnp.allclose(out, ref, atol=1e-3, rtol=1e-3), max_err

    print("KERNEL_OK")
</pallas_src>

<mosaic_0001>
module attributes {stable_mosaic.version = 11 : i64} {
  func.func @mlp_kernel(%arg0: i32, %arg1: memref<256x16xbf16, #tpu.memory_space<vmem>>, %arg2: memref<16x32xbf16, #tpu.memory_space<vmem>>, %arg3: memref<1x32xf32, #tpu.memory_space<vmem>>, %arg4: memref<8x32xbf16, #tpu.memory_space<vmem>>, %arg5: memref<8x1xf32, #tpu.memory_space<vmem>>, %arg6: memref<8x256xf32, #tpu.memory_space<vmem>>) attributes {dimension_semantics = [#tpu.dimension_semantics<parallel>], iteration_bounds = array<i64: 2>, scalar_prefetch = 0 : i64, scratch_operands = 0 : i64, tpu.core_type = #tpu.core_type<tc>, window_params = [{transform_indices = @transform_0, window_bounds = array<i64: 256, 16>}, {pipeline_mode = #tpu.pipeline_mode<synchronous>, transform_indices = @transform_1, window_bounds = array<i64: 16, 32>}, {pipeline_mode = #tpu.pipeline_mode<synchronous>, transform_indices = @transform_2, window_bounds = array<i64: 1, 32>}, {pipeline_mode = #tpu.pipeline_mode<synchronous>, transform_indices = @transform_3, window_bounds = array<i64: 8, 32>}, {pipeline_mode = #tpu.pipeline_mode<synchronous>, transform_indices = @transform_4, window_bounds = array<i64: 8, 1>}, {transform_indices = @transform_5, window_bounds = array<i64: 8, 256>}]} {
    %c0 = arith.constant 0 : index
    %c0_0 = arith.constant 0 : index
    %0 = vector.load %arg1[%c0, %c0_0] : memref<256x16xbf16, #tpu.memory_space<vmem>>, vector<256x16xbf16>
    %c0_1 = arith.constant 0 : index
    %c0_2 = arith.constant 0 : index
    %1 = vector.load %arg2[%c0_1, %c0_2] : memref<16x32xbf16, #tpu.memory_space<vmem>>, vector<16x32xbf16>
    %cst = arith.constant dense<0.000000e+00> : vector<256x32xf32>
    %2 = tpu.matmul %0, %1, %cst {dimension_numbers = #tpu.dot_dimension_numbers<[1], [0], [0], [1], [0, 0, 1, 1], [], []>} : vector<256x16xbf16>, vector<16x32xbf16>, vector<256x32xf32> -> vector<256x32xf32>
    %c0_3 = arith.constant 0 : index
    %c0_4 = arith.constant 0 : index
    %3 = vector.load %arg3[%c0_3, %c0_4] : memref<1x32xf32, #tpu.memory_space<vmem>>, vector<1x32xf32>
    %4 = vector.broadcast %3 : vector<1x32xf32> to vector<256x32xf32>
    %5 = arith.addf %2, %4 : vector<256x32xf32>
    %cst_5 = arith.constant 0.000000e+00 : f32
    %6 = vector.broadcast %cst_5 : f32 to vector<256x32xf32>
    %7 = arith.maximumf %5, %6 : vector<256x32xf32>
    %c0_6 = arith.constant 0 : index
    %c0_7 = arith.constant 0 : index
    %8 = vector.load %arg4[%c0_6, %c0_7] : memref<8x32xbf16, #tpu.memory_space<vmem>>, vector<8x32xbf16>
    %9 = arith.truncf %7 : vector<256x32xf32> to vector<256x32xbf16>
    %cst_8 = arith.constant dense<0.000000e+00> : vector<8x256xf32>
    %10 = tpu.matmul %8, %9, %cst_8 {dimension_numbers = #tpu.dot_dimension_numbers<[1], [1], [0], [0], [0, 0, 1, 0], [], []>} : vector<8x32xbf16>, vector<256x32xbf16>, vector<8x256xf32> -> vector<8x256xf32>
    %c0_9 = arith.constant 0 : index
    %c0_10 = arith.constant 0 : index
    %11 = vector.load %arg5[%c0_9, %c0_10] : memref<8x1xf32, #tpu.memory_space<vmem>>, vector<8x1xf32>
    %12 = vector.broadcast %11 : vector<8x1xf32> to vector<8x256xf32>
    %13 = arith.addf %10, %12 : vector<8x256xf32>
    %c0_11 = arith.constant 0 : index
    %c0_12 = arith.constant 0 : index
    %14 = vector.load %arg6[%c0_11, %c0_12] : memref<8x256xf32, #tpu.memory_space<vmem>>, vector<8x256xf32>
    tpu.vector_store %arg6[%c0_11, %c0_12], %13 {strides = array<i32>} : memref<8x256xf32, #tpu.memory_space<vmem>>, vector<8x256xf32>,
    return
  }
  func.func @transform_0(%arg0: i32) -> (i32, i32) {
    %c0_i32 = arith.constant 0 : i32
    %c0_i32_0 = arith.constant 0 : i32
    return %arg0, %c0_i32 : i32, i32
  }
  func.func @transform_1(%arg0: i32) -> (i32, i32) {
    %c0_i32 = arith.constant 0 : i32
    %c0_i32_0 = arith.constant 0 : i32
    %c0_i32_1 = arith.constant 0 : i32
    return %c0_i32, %c0_i32_0 : i32, i32
  }
  func.func @transform_2(%arg0: i32) -> (i32, i32) {
    %c0_i32 = arith.constant 0 : i32
    %c0_i32_0 = arith.constant 0 : i32
    %c0_i32_1 = arith.constant 0 : i32
    return %c0_i32, %c0_i32_0 : i32, i32
  }
  func.func @transform_3(%arg0: i32) -> (i32, i32) {
    %c0_i32 = arith.constant 0 : i32
    %c0_i32_0 = arith.constant 0 : i32
    %c0_i32_1 = arith.constant 0 : i32
    return %c0_i32, %c0_i32_0 : i32, i32
  }
  func.func @transform_4(%arg0: i32) -> (i32, i32) {
    %c0_i32 = arith.constant 0 : i32
    %c0_i32_0 = arith.constant 0 : i32
    %c0_i32_1 = arith.constant 0 : i32
    return %c0_i32, %c0_i32_0 : i32, i32
  }
  func.func @transform_5(%arg0: i32) -> (i32, i32) {
    %c0_i32 = arith.constant 0 : i32
    %c0_i32_0 = arith.constant 0 : i32
    return %c0_i32, %arg0 : i32, i32
  }
}

</mosaic_0001>

<llo_original>
// kernel: tpu_custom_call.1
$region0: #{tpu_custom_call.1}
  #allocation0 [shape = 'u32[]', space=smem, size = 0x4, offset = 0x4, fixed_abs, tag = 'smem constant byte address 0x4 - core index']
  #allocation1 [shape = 'u32[144,128]{1,0:T(1,128)}', space=vmem, size = 0x12000, scoped, tag = 'internal scratch']
  %s0 = inlined_call_operand.vmem [shape: bf16[512,16], index: 0, kind: input, shape index: {}]
  %s1 = inlined_call_operand.vmem [shape: bf16[16,32], index: 1, kind: input, shape index: {}]
  %s2 = inlined_call_operand.vmem [shape: f32[1,32], index: 2, kind: input, shape index: {}]
  %s3 = inlined_call_operand.vmem [shape: bf16[8,32], index: 3, kind: input, shape index: {}]
  %s4 = inlined_call_operand.vmem [shape: f32[8,1], index: 4, kind: input, shape index: {}]
  %s5 = inlined_call_operand.hbm [shape: f32[8,512], index: 5, kind: output, shape index: {}]
  %s6 = sld [smem:[#allocation0]]
  $region53: #{tpu_custom_call.1} parent=0
    _
  %s8 = ssub.s32 1, %s6
  %s9 = scalar_select 0, %s8, %s6
  $region1: #{tpu_custom_call.1} parent=0
    #allocation2 [shape = 'u8[16384]{0}', space=vmem, size = 0x4000, scoped, tag = 'output window, operand 0']
    #allocation3 [shape = 's32[2]{0}', space=sflag, size = 0x8, scoped, tag = 'scoped memory for tpu_custom_call.1']
    %10 = vsyncpa [#allocation3], 0
    %s11 = scalar_lea.sflag [#allocation3], 1
    %12 = vsyncpa %s11, 0
    loop: start=0, step=1, limit=4
    $region2: #{tpu_custom_call.1} parent=1 // loop_pre_header
      _
    $region3: #{tpu_custom_call.1} parent=1 // loop_header
      %s14 = sphi 0, %s18
      %p15 = scmp.ge.s32.totalorder %s14, 4
      %s24 = sphi 0, %s26
      %s27 = sphi 0, %s24
      %s28 = sphi 0, %s27
      %s44 = sphi 0, %s28
      %s48 = sphi 0, %s48
      %s50 = sphi 0, %s48
      %s51 = sphi 0, %s50
      %s65 = sphi 0, %s51
      %s69 = sphi 0, %s69
      %s71 = sphi 0, %s69
      %s72 = sphi 0, %s71
      %s86 = sphi 0, %s72
      %s90 = sphi 0, %s90
      %s92 = sphi 0, %s90
      %s93 = sphi 0, %s92
      %s107 = sphi 0, %s93
      %s111 = sphi 0, %s111
      %s113 = sphi 0, %s111
      %s114 = sphi 0, %s113
      %s128 = sphi 0, %s114
      %s134 = sphi 0, %s136
      %s137 = sphi 0, %s134
      %s138 = sphi 0, %s137
      %s154 = sphi 0, %s138
    $region4: #{tpu_custom_call.1} parent=1 // loop_header_branch
      %17 = sbr.rel (%p15) target = $region8
    $region5: #{tpu_custom_call.1} parent=1 // loop_body
      %s19 = ssub.s32 %s14, 1
      %s20 = ssub.s32 %s14, 2
      %s21 = sadd.s32 %s14, 1
      %s22 = ssub.s32 %s14, %s21
      %p23 = scmp.eq.s32.totalorder %s22, 0
      %s25 = sadd.s32 %s24, 1
      %s26 = scalar_select %p23, %s24, %s25
      %p29 = pneg %p23
      %p30 = scmp.eq.s32.totalorder %s14, 1
      %p31 = por %p29, %p30
      %p32 = scmp.ne.s32.totalorder %s24, %s27
      %p33 = scmp.eq.s32.totalorder %s14, 0
      %p34 = por %p32, %p33
      %p35 = scmp.ne.s32.totalorder %s24, %s27
      %p36 = scmp.eq.s32.totalorder %s19, 1
      %p37 = por %p35, %p36
      %p38 = scmp.ne.s32.totalorder %s27, %s28
      %p39 = scmp.eq.s32.totalorder %s19, 0
      %p40 = por %p38, %p39
      %p41 = scmp.ne.s32.totalorder %s27, %s28
      %p42 = scmp.eq.s32.totalorder %s20, 1
      %p43 = por %p41, %p42
      %p45 = scmp.ne.s32.totalorder %s28, %s44
      %p46 = scmp.eq.s32.totalorder %s20, 0
      %p47 = por %p45, %p46
      %s49 = sadd.s32 %s48, 1
      %p52 = scmp.eq.s32.totalorder %s14, 1
      %p53 = scmp.ne.s32.totalorder %s48, %s50
      %p54 = scmp.eq.s32.totalorder %s14, 0
      %p55 = por %p53, %p54
      %p56 = scmp.ne.s32.totalorder %s48, %s50
      %p57 = scmp.eq.s32.totalorder %s19, 1
      %p58 = por %p56, %p57
      %p59 = scmp.ne.s32.totalorder %s50, %s51
      %p60 = scmp.eq.s32.totalorder %s19, 0
      %p61 = por %p59, %p60
      %p62 = scmp.ne.s32.totalorder %s50, %s51
      %p63 = scmp.eq.s32.totalorder %s20, 1
      %p64 = por %p62, %p63
      %p66 = scmp.ne.s32.totalorder %s51, %s65
      %p67 = scmp.eq.s32.totalorder %s20, 0
      %p68 = por %p66, %p67
      %s70 = sadd.s32 %s69, 1
      %p73 = scmp.eq.s32.totalorder %s14, 1
      %p74 = scmp.ne.s32.totalorder %s69, %s71
      %p75 = scmp.eq.s32.totalorder %s14, 0
      %p76 = por %p74, %p75
      %p77 = scmp.ne.s32.totalorder %s69, %s71
      %p78 = scmp.eq.s32.totalorder %s19, 1
      %p79 = por %p77, %p78
      %p80 = scmp.ne.s32.totalorder %s71, %s72
      %p81 = scmp.eq.s32.totalorder %s19, 0
      %p82 = por %p80, %p81
      %p83 = scmp.ne.s32.totalorder %s71, %s72
      %p84 = scmp.eq.s32.totalorder %s20, 1
      %p85 = por %p83, %p84
      %p87 = scmp.ne.s32.totalorder %s72, %s86
      %p88 = scmp.eq.s32.totalorder %s20, 0
      %p89 = por %p87, %p88
      %s91 = sadd.s32 %s90, 1
      %p94 = scmp.eq.s32.totalorder %s14, 1
      %p95 = scmp.ne.s32.totalorder %s90, %s92
      %p96 = scmp.eq.s32.totalorder %s14, 0
      %p97 = por %p95, %p96
      %p98 = scmp.ne.s32.totalorder %s90, %s92
      %p99 = scmp.eq.s32.totalorder %s19, 1
      %p100 = por %p98, %p99
      %p101 = scmp.ne.s32.totalorder %s92, %s93
      %p102 = scmp.eq.s32.totalorder %s19, 0
      %p103 = por %p101, %p102
      %p104 = scmp.ne.s32.totalorder %s92, %s93
      %p105 = scmp.eq.s32.totalorder %s20, 1
      %p106 = por %p104, %p105
      %p108 = scmp.ne.s32.totalorder %s93, %s107
      %p109 = scmp.eq.s32.totalorder %s20, 0
      %p110 = por %p108, %p109
      %s112 = sadd.s32 %s111, 1
      %p115 = scmp.eq.s32.totalorder %s14, 1
      %p116 = scmp.ne.s32.totalorder %s111, %s113
      %p117 = scmp.eq.s32.totalorder %s14, 0
      %p118 = por %p116, %p117
      %p119 = scmp.ne.s32.totalorder %s111, %s113
      %p120 = scmp.eq.s32.totalorder %s19, 1
      %p121 = por %p119, %p120
      %p122 = scmp.ne.s32.totalorder %s113, %s114
      %p123 = scmp.eq.s32.totalorder %s19, 0
      %p124 = por %p122, %p123
      %p125 = scmp.ne.s32.totalorder %s113, %s114
      %p126 = scmp.eq.s32.totalorder %s20, 1
      %p127 = por %p125, %p126
      %p129 = scmp.ne.s32.totalorder %s114, %s128
      %p130 = scmp.eq.s32.totalorder %s20, 0
      %p131 = por %p129, %p130
      %s132 = ssub.s32 %s14, %s21
      %p133 = scmp.eq.s32.totalorder %s132, 0
      %s135 = sadd.s32 %s134, 1
      %s136 = scalar_select %p133, %s134, %s135
      %p139 = pneg %p133
      %p140 = scmp.eq.s32.totalorder %s14, 1
      %p141 = por %p139, %p140
      %p142 = scmp.ne.s32.totalorder %s134, %s137
      %p143 = scmp.eq.s32.totalorder %s14, 0
      %p144 = por %p142, %p143
      %p145 = scmp.ne.s32.totalorder %s134, %s137
      %p146 = scmp.eq.s32.totalorder %s19, 1
      %p147 = por %p145, %p146
      %p148 = scmp.ne.s32.totalorder %s137, %s138
      %p149 = scmp.eq.s32.totalorder %s19, 0
      %p150 = por %p148, %p149
      %p151 = scmp.ne.s32.totalorder %s137, %s138
      %p152 = scmp.eq.s32.totalorder %s20, 1
      %p153 = por %p151, %p152
      %p155 = scmp.ne.s32.totalorder %s138, %s154
      %p156 = scmp.eq.s32.totalorder %s20, 0
      %p157 = por %p155, %p156
      %p158 = scmp.le.s32.totalorder 1, %s14
      %p159 = scmp.lt.s32.totalorder %s14, 3
      %p160 = pnand %p158, %p159
      %p161 = pneg %p160
      // Predicated region
      $region9: #{tpu_custom_call.1} parent=5 // pred_check
        _
      $region10: #{tpu_custom_call.1} parent=5 // pred_check_branch
        %163 = sbr.rel (%p160) target = $region12
      $region11: #{tpu_custom_call.1} parent=5 // pred_region
        %s164 = ssub.s32 %s14, 1
        // Predicated region
        $region13: #{tpu_custom_call.1} parent=11 // pred_check
          %p165 = pneg %p61
        $region14: #{tpu_custom_call.1} parent=11 // pred_check_branch
          %167 = sbr.rel (%p165) target = $region16
        $region15: #{tpu_custom_call.1} parent=11 // pred_region
          _
        $region16: #{tpu_custom_call.1} parent=11 // pred_fallthru
          _
        // Predicated region
        $region17: #{tpu_custom_call.1} parent=11 // pred_check
          %p168 = pneg %p82
        $region18: #{tpu_custom_call.1} parent=11 // pred_check_branch
          %170 = sbr.rel (%p168) target = $region20
        $region19: #{tpu_custom_call.1} parent=11 // pred_region
          _
        $region20: #{tpu_custom_call.1} parent=11 // pred_fallthru
          _
        // Predicated region
        $region21: #{tpu_custom_call.1} parent=11 // pred_check
          %p171 = pneg %p103
        $region22: #{tpu_custom_call.1} parent=11 // pred_check_branch
          %173 = sbr.rel (%p171) target = $region24
        $region23: #{tpu_custom_call.1} parent=11 // pred_region
          _
        $region24: #{tpu_custom_call.1} parent=11 // pred_fallthru
          _
        // Predicated region
        $region25: #{tpu_custom_call.1} parent=11 // pred_check
          %p174 = pneg %p124
        $region26: #{tpu_custom_call.1} parent=11 // pred_check_branch
          %176 = sbr.rel (%p174) target = $region28
        $region27: #{tpu_custom_call.1} parent=11 // pred_region
          _
        $region28: #{tpu_custom_call.1} parent=11 // pred_fallthru
          _
      $region12: #{tpu_custom_call.1} parent=5 // pred_fallthru
        _
      %p177 = scmp.lt.s32.totalorder %s14, 2
      // Predicated region
      $region29: #{tpu_custom_call.1} parent=5 // pred_check
        %p178 = pneg %p177
      $region30: #{tpu_custom_call.1} parent=5 // pred_check_branch
        %180 = sbr.rel (%p178) target = $region32
      $region31: #{tpu_custom_call.1} parent=5 // pred_region
        // Predicated region
        $region33: #{tpu_custom_call.1} parent=31 // pred_check
          %p181 = pneg %p34
        $region34: #{tpu_custom_call.1} parent=31 // pred_check_branch
          %183 = sbr.rel (%p181) target = $region36
        $region35: #{tpu_custom_call.1} parent=31 // pred_region
          %s184 = smul.u32 32, %s14
          %p185 = scmp.lt.s32.totalorder %s184, 63
          %s186 = scalar_select %p185, %s184, 63
          %s187 = smul.addr %s186, 4
          %s188 = scalar_lea.vmem %s0, %s187
          %s189 = smul.u32 32, %s14
        $region36: #{tpu_custom_call.1} parent=31 // pred_fallthru
          _
      $region32: #{tpu_custom_call.1} parent=5 // pred_fallthru
        _
      %p190 = scmp.le.s32.totalorder 1, %s14
      %p191 = scmp.lt.s32.totalorder %s14, 3
      %p192 = pnand %p190, %p191
      %p193 = pneg %p192
      // Predicated region
      $region37: #{tpu_custom_call.1} parent=5 // pred_check
        _
      $region38: #{tpu_custom_call.1} parent=5 // pred_check_branch
        %195 = sbr.rel (%p192) target = $region40
      $region39: #{tpu_custom_call.1} parent=5 // pred_region
        %s196 = ssub.s32 %s14, 1
        %s197 = smul.u32 32, %s19
        %p198 = scmp.lt.s32.totalorder %s197, 63
        %s199 = scalar_select %p198, %s197, 63
        %s200 = smul.addr %s199, 4
        %s201 = scalar_lea.vmem %s0, %s200
        %p202 = pneg %p40
        %p203 = pneg %p37
        %p204 = pneg %p61
        %p205 = pneg %p58
        %p206 = pneg %p82
        %p207 = pneg %p79
        %p208 = pneg %p103
        %p209 = pneg %p100
        %p210 = pneg %p124
        %p211 = pneg %p121
        %p212 = pneg %p150
        %p213 = pneg %p147
        %s214 = sand.u32 %s137, 1
        %s215 = scalar_lea.sflag [#allocation3], %s214
        %s216 = sand.u32 %s137, 1
        %s217 = smul.addr %s216, 16
        %s218 = scalar_lea.vmem [#allocation2], %s217
        %s219 = smul.u32 32, %s19
        %p220 = scmp.lt.s32.totalorder %s219, 63
        %s221 = scalar_select %p220, %s219, 63
        %s222 = smul.addr %s221, 4
        %s223 = scalar_lea.vmem %s0, %s222
        %s224 = smul.u32 32, %s19
        %s225 = smul.u32 2, %s19
        %v227 = vld [vmem:[%s223] sm:$0xf]
        %v228 = vld [vmem:[%s223 + $0x4] sm:$0xf]
        %v229 = vld [vmem:[%s223 + $0x8] sm:$0xf]
        %v230 = vld [vmem:[%s223 + $0xc] sm:$0xf]
        %v231 = vld [vmem:[%s223 + $0x10] sm:$0xf]
        %v232 = vld [vmem:[%s223 + $0x14] sm:$0xf]
        %v233 = vld [vmem:[%s223 + $0x18] sm:$0xf]
        %v234 = vld [vmem:[%s223 + $0x1c] sm:$0xf]
        %v235 = vld [vmem:[%s223 + $0x20] sm:$0xf]
        %v236 = vld [vmem:[%s223 + $0x24] sm:$0xf]
        %v237 = vld [vmem:[%s223 + $0x28] sm:$0xf]
        %v238 = vld [vmem:[%s223 + $0x2c] sm:$0xf]
        %v239 = vld [vmem:[%s223 + $0x30] sm:$0xf]
        %v240 = vld [vmem:[%s223 + $0x34] sm:$0xf]
        %v241 = vld [vmem:[%s223 + $0x38] sm:$0xf]
        %v242 = vld [vmem:[%s223 + $0x3c] sm:$0xf]
        %v243 = vld [vmem:[%s223 + $0x40] sm:$0xf]
        %v244 = vld [vmem:[%s223 + $0x44] sm:$0xf]
        %v245 = vld [vmem:[%s223 + $0x48] sm:$0xf]
        %v246 = vld [vmem:[%s223 + $0x4c] sm:$0xf]
        %v247 = vld [vmem:[%s223 + $0x50] sm:$0xf]
        %v248 = vld [vmem:[%s223 + $0x54] sm:$0xf]
        %v249 = vld [vmem:[%s223 + $0x58] sm:$0xf]
        %v250 = vld [vmem:[%s223 + $0x5c] sm:$0xf]
        %v251 = vld [vmem:[%s223 + $0x60] sm:$0xf]
        %v252 = vld [vmem:[%s223 + $0x64] sm:$0xf]
        %v253 = vld [vmem:[%s223 + $0x68] sm:$0xf]
        %v254 = vld [vmem:[%s223 + $0x6c] sm:$0xf]
        %v255 = vld [vmem:[%s223 + $0x70] sm:$0xf]
        %v256 = vld [vmem:[%s223 + $0x74] sm:$0xf]
        %v257 = vld [vmem:[%s223 + $0x78] sm:$0xf]
        %v258 = vld [vmem:[%s223 + $0x7c] sm:$0xf]
        %v259 = vld [vmem:[%s1] sm:$0xf]
        %v260 = vld [vmem:[%s1 + $0x4] sm:$0xf]
        %v261 = vld [vmem:[%s2] sm:$0x1]
        %v263 = vlaneseq
        %v264 = vshrl.u32 %v263, 7
        %v265 = vsub.s32 0, %v264
        %v266 = vrot.slane %v261, %v265
        %v300 = vunpack.c.l.b16 %v227
        %v301 = vunpack.c.l.b16 %v228
        %v302 = vunpack.c.l.b16 %v229
        %v303 = vunpack.c.l.b16 %v230
        %v304 = vunpack.c.l.b16 %v231
        %v305 = vunpack.c.l.b16 %v232
        %v306 = vunpack.c.l.b16 %v233
        %v307 = vunpack.c.l.b16 %v234
        %v308 = vunpack.c.l.b16 %v235
        %v309 = vunpack.c.l.b16 %v236
        %v310 = vunpack.c.l.b16 %v237
        %v311 = vunpack.c.l.b16 %v238
        %v312 = vunpack.c.l.b16 %v239
        %v313 = vunpack.c.l.b16 %v240
        %v314 = vunpack.c.l.b16 %v241
        %v315 = vunpack.c.l.b16 %v242
        %v316 = vunpack.c.l.b16 %v243
        %v317 = vunpack.c.l.b16 %v244
        %v318 = vunpack.c.l.b16 %v245
        %v319 = vunpack.c.l.b16 %v246
        %v320 = vunpack.c.l.b16 %v247
        %v321 = vunpack.c.l.b16 %v248
        %v322 = vunpack.c.l.b16 %v249
        %v323 = vunpack.c.l.b16 %v250
        %v324 = vunpack.c.l.b16 %v251
        %v325 = vunpack.c.l.b16 %v252
        %v326 = vunpack.c.l.b16 %v253
        %v327 = vunpack.c.l.b16 %v254
        %v328 = vunpack.c.l.b16 %v255
        %v329 = vunpack.c.l.b16 %v256
        %v330 = vunpack.c.l.b16 %v257
        %v331 = vunpack.c.l.b16 %v258
        %v332 = vpack.c.b16 %v301, %v300
        %v333 = vpack.c.b16 %v303, %v302
        %v334 = vpack.c.b16 %v305, %v304
        %v335 = vpack.c.b16 %v307, %v306
        %v336 = vpack.c.b16 %v309, %v308
        %v337 = vpack.c.b16 %v311, %v310
        %v338 = vpack.c.b16 %v313, %v312
        %v339 = vpack.c.b16 %v315, %v314
        %v340 = vpack.c.b16 %v317, %v316
        %v341 = vpack.c.b16 %v319, %v318
        %v342 = vpack.c.b16 %v321, %v320
        %v343 = vpack.c.b16 %v323, %v322
        %v344 = vpack.c.b16 %v325, %v324
        %v345 = vpack.c.b16 %v327, %v326
        %v346 = vpack.c.b16 %v329, %v328
        %v347 = vpack.c.b16 %v331, %v330
        %v350 = vunpack.c.l.b16 %v259
        %v351 = vunpack.c.l.b16 %v260
        %v352 = vpack.c.b16 %v351, %v350
        %vm354 = vcmask 130048
        %v356 = vsel %vm354, %v332, 0
        %v359 = vsel %vm354, %v333, 0
        %v362 = vsel %vm354, %v334, 0
        %v365 = vsel %vm354, %v335, 0
        %v368 = vsel %vm354, %v336, 0
        %v371 = vsel %vm354, %v337, 0
        %v374 = vsel %vm354, %v338, 0
        %v377 = vsel %vm354, %v339, 0
        %v380 = vsel %vm354, %v340, 0
        %v383 = vsel %vm354, %v341, 0
        %v386 = vsel %vm354, %v342, 0
        %v389 = vsel %vm354, %v343, 0
        %v392 = vsel %vm354, %v344, 0
        %v395 = vsel %vm354, %v345, 0
        %v398 = vsel %vm354, %v346, 0
        %v401 = vsel %vm354, %v347, 0
        %403 = vmatprep.subr.bf16.mxu0 0
        %404 = vmatpush1.bf16.msra.mxu0 %v352
        %405 = vmatprep.subr.bf16.mxu0 0
        %406 = vmatpush1.bf16.msra.mxu0 0
        %407 = vmatprep.subr.bf16.mxu0 0
        %408 = vmatpush1.bf16.msra.mxu0 0
        %409 = vmatprep.subr.bf16.mxu0 0
        %410 = vmatpush1.bf16.msra.mxu0 0
        %411 = vmatprep.subr.bf16.mxu0 0
        %412 = vmatpush1.bf16.msra.mxu0 0
        %413 = vmatprep.subr.bf16.mxu0 0
        %414 = vmatpush1.bf16.msra.mxu0 0
        %415 = vmatprep.subr.bf16.mxu0 0
        %416 = vmatpush1.bf16.msra.mxu0 0
        %417 = vmatprep.subr.bf16.mxu0 0
        %418 = vmatpush1.bf16.msra.mxu0 0
        %419 = vmatprep.subr.bf16.mxu0 0
        %420 = vmatpush1.bf16.msra.mxu0 0
        %421 = vmatprep.subr.bf16.mxu0 0
        %422 = vmatpush1.bf16.msra.mxu0 0
        %423 = vmatprep.subr.bf16.mxu0 0
        %424 = vmatpush1.bf16.msra.mxu0 0
        %425 = vmatprep.subr.bf16.mxu0 0
        %426 = vmatpush1.bf16.msra.mxu0 0
        %427 = vmatprep.subr.bf16.mxu0 0
        %428 = vmatpush1.bf16.msra.mxu0 0
        %429 = vmatprep.subr.bf16.mxu0 0
        %430 = vmatpush1.bf16.msra.mxu0 0
        %431 = vmatprep.subr.bf16.mxu0 0
        %432 = vmatpush1.bf16.msra.mxu0 0
        %433 = vmatprep.subr.bf16.mxu0 0
        %434 = vmatpush1.bf16.msra.mxu0 0
        %435 = vmatprep.mubr.bf16.mxu0 0
        %436 = vmatmul.mubr.bf16.gmra.mrb[0].mxu0 %v356
        %v437 = vpop.f32.mrb[0].mxu0
        %v438 = vadd.f32 %v266, %v437
        %v439 = vpop.f32.mrb[0].mxu0
        %v440 = vpop.f32.mrb[0].mxu0
        %v441 = vadd.f32 %v266, %v440
        %v442 = vpop.f32.mrb[0].mxu0
        %443 = vmatprep.mubr.bf16.mxu0 0
        %444 = vmatmul.mubr.bf16.gmra.mrb[0].mxu0 %v359
        %v445 = vpop.f32.mrb[0].mxu0
        %v446 = vadd.f32 %v266, %v445
        %v447 = vpop.f32.mrb[0].mxu0
        %v448 = vpop.f32.mrb[0].mxu0
        %v449 = vadd.f32 %v266, %v448
        %v450 = vpop.f32.mrb[0].mxu0
        %451 = vmatprep.mubr.bf16.mxu0 0
        %452 = vmatmul.mubr.bf16.gmra.mrb[0].mxu0 %v362
        %v453 = vpop.f32.mrb[0].mxu0
        %v454 = vadd.f32 %v266, %v453
        %v455 = vpop.f32.mrb[0].mxu0
        %v456 = vpop.f32.mrb[0].mxu0
        %v457 = vadd.f32 %v266, %v456
        %v458 = vpop.f32.mrb[0].mxu0
        %459 = vmatprep.mubr.bf16.mxu0 0
        %460 = vmatmul.mubr.bf16.gmra.mrb[0].mxu0 %v365
        %v461 = vpop.f32.mrb[0].mxu0
        %v462 = vadd.f32 %v266, %v461
        %v463 = vpop.f32.mrb[0].mxu0
        %v464 = vpop.f32.mrb[0].mxu0
        %v465 = vadd.f32 %v266, %v464
        %v466 = vpop.f32.mrb[0].mxu0
        %467 = vmatprep.mubr.bf16.mxu0 0
        %468 = vmatmul.mubr.bf16.gmra.mrb[0].mxu0 %v368
        %v469 = vpop.f32.mrb[0].mxu0
        %v470 = vadd.f32 %v266, %v469
        %v471 = vpop.f32.mrb[0].mxu0
        %v472 = vpop.f32.mrb[0].mxu0
        %v473 = vadd.f32 %v266, %v472
        %v474 = vpop.f32.mrb[0].mxu0
        %475 = vmatprep.mubr.bf16.mxu0 0
        %476 = vmatmul.mubr.bf16.gmra.mrb[0].mxu0 %v371
        %v477 = vpop.f32.mrb[0].mxu0
        %v478 = vadd.f32 %v266, %v477
        %v479 = vpop.f32.mrb[0].mxu0
        %v480 = vpop.f32.mrb[0].mxu0
        %v481 = vadd.f32 %v266, %v480
        %v482 = vpop.f32.mrb[0].mxu0
        %483 = vmatprep.mubr.bf16.mxu0 0
        %484 = vmatmul.mubr.bf16.gmra.mrb[0].mxu0 %v374
        %v485 = vpop.f32.mrb[0].mxu0
        %v486 = vadd.f32 %v266, %v485
        %v487 = vpop.f32.mrb[0].mxu0
        %v488 = vpop.f32.mrb[0].mxu0
        %v489 = vadd.f32 %v266, %v488
        %v490 = vpop.f32.mrb[0].mxu0
        %491 = vmatprep.mubr.bf16.mxu0 0
        %492 = vmatmul.mubr.bf16.gmra.mrb[0].mxu0 %v377
        %v493 = vpop.f32.mrb[0].mxu0
        %v494 = vadd.f32 %v266, %v493
        %v495 = vpop.f32.mrb[0].mxu0
        %v496 = vpop.f32.mrb[0].mxu0
        %v497 = vadd.f32 %v266, %v496
        %v498 = vpop.f32.mrb[0].mxu0
        %499 = vmatprep.mubr.bf16.mxu0 0
        %500 = vmatmul.mubr.bf16.gmra.mrb[0].mxu0 %v380
        %v501 = vpop.f32.mrb[0].mxu0
        %v502 = vadd.f32 %v266, %v501
        %v503 = vpop.f32.mrb[0].mxu0
        %v504 = vpop.f32.mrb[0].mxu0
        %v505 = vadd.f32 %v266, %v504
        %v506 = vpop.f32.mrb[0].mxu0
        %507 = vmatprep.mubr.bf16.mxu0 0
        %508 = vmatmul.mubr.bf16.gmra.mrb[0].mxu0 %v383
        %v509 = vpop.f32.mrb[0].mxu0
        %v510 = vadd.f32 %v266, %v509
        %v511 = vpop.f32.mrb[0].mxu0
        %v512 = vpop.f32.mrb[0].mxu0
        %v513 = vadd.f32 %v266, %v512
        %v514 = vpop.f32.mrb[0].mxu0
        %515 = vmatprep.mubr.bf16.mxu0 0
        %516 = vmatmul.mubr.bf16.gmra.mrb[0].mxu0 %v386
        %v517 = vpop.f32.mrb[0].mxu0
        %v518 = vadd.f32 %v266, %v517
        %v519 = vpop.f32.mrb[0].mxu0
        %v520 = vpop.f32.mrb[0].mxu0
        %v521 = vadd.f32 %v266, %v520
        %v522 = vpop.f32.mrb[0].mxu0
        %523 = vmatprep.mubr.bf16.mxu0 0
        %524 = vmatmul.mubr.bf16.gmra.mrb[0].mxu0 %v389
        %v525 = vpop.f32.mrb[0].mxu0
        %v526 = vadd.f32 %v266, %v525
        %v527 = vpop.f32.mrb[0].mxu0
        %v528 = vpop.f32.mrb[0].mxu0
        %v529 = vadd.f32 %v266, %v528
        %v530 = vpop.f32.mrb[0].mxu0
        %531 = vmatprep.mubr.bf16.mxu0 0
        %532 = vmatmul.mubr.bf16.gmra.mrb[0].mxu0 %v392
        %v533 = vpop.f32.mrb[0].mxu0
        %v534 = vadd.f32 %v266, %v533
        %v535 = vpop.f32.mrb[0].mxu0
        %v536 = vpop.f32.mrb[0].mxu0
        %v537 = vadd.f32 %v266, %v536
        %v538 = vpop.f32.mrb[0].mxu0
        %539 = vmatprep.mubr.bf16.mxu0 0
        %540 = vmatmul.mubr.bf16.gmra.mrb[0].mxu0 %v395
        %v541 = vpop.f32.mrb[0].mxu0
        %v542 = vadd.f32 %v266, %v541
        %v543 = vpop.f32.mrb[0].mxu0
        %v544 = vpop.f32.mrb[0].mxu0
        %v545 = vadd.f32 %v266, %v544
        %v546 = vpop.f32.mrb[0].mxu0
        %547 = vmatprep.mubr.bf16.mxu0 0
        %548 = vmatmul.mubr.bf16.gmra.mrb[0].mxu0 %v398
        %v549 = vpop.f32.mrb[0].mxu0
        %v550 = vadd.f32 %v266, %v549
        %v551 = vpop.f32.mrb[0].mxu0
        %v552 = vpop.f32.mrb[0].mxu0
        %v553 = vadd.f32 %v266, %v552
        %v554 = vpop.f32.mrb[0].mxu0
        %555 = vmatprep.mubr.bf16.mxu0 0
        %556 = vmatmul.mubr.bf16.gmra.mrb[0].mxu0 %v401
        %v557 = vpop.f32.mrb[0].mxu0
        %v558 = vadd.f32 %v266, %v557
        %v559 = vpop.f32.mrb[0].mxu0
        %v560 = vpop.f32.mrb[0].mxu0
        %v561 = vadd.f32 %v266, %v560
        %v562 = vpop.f32.mrb[0].mxu0
        %563 = vdwg.mxu0
        %v564 = vmax.f32 %v438, 0.0
        %v565 = vmax.f32 %v441, 0.0
        %v566 = vmax.f32 %v446, 0.0
        %v567 = vmax.f32 %v449, 0.0
        %v568 = vmax.f32 %v454, 0.0
        %v569 = vmax.f32 %v457, 0.0
        %v570 = vmax.f32 %v462, 0.0
        %v571 = vmax.f32 %v465, 0.0
        %v572 = vmax.f32 %v470, 0.0
        %v573 = vmax.f32 %v473, 0.0
        %v574 = vmax.f32 %v478, 0.0
        %v575 = vmax.f32 %v481, 0.0
        %v576 = vmax.f32 %v486, 0.0
        %v577 = vmax.f32 %v489, 0.0
        %v578 = vmax.f32 %v494, 0.0
        %v579 = vmax.f32 %v497, 0.0
        %v580 = vmax.f32 %v502, 0.0
        %v581 = vmax.f32 %v505, 0.0
        %v582 = vmax.f32 %v510, 0.0
        %v583 = vmax.f32 %v513, 0.0
        %v584 = vmax.f32 %v518, 0.0
        %v585 = vmax.f32 %v521, 0.0
        %v586 = vmax.f32 %v526, 0.0
        %v587 = vmax.f32 %v529, 0.0
        %v588 = vmax.f32 %v534, 0.0
        %v589 = vmax.f32 %v537, 0.0
        %v590 = vmax.f32 %v542, 0.0
        %v591 = vmax.f32 %v545, 0.0
        %v592 = vmax.f32 %v550, 0.0
        %v593 = vmax.f32 %v553, 0.0
        %v594 = vmax.f32 %v558, 0.0
        %v595 = vmax.f32 %v561, 0.0
        %v596 = vld [vmem:[%s3] sm:$0xf]
        %v597 = vpack.c.bf16 %v565, %v564
        %v598 = vpack.c.bf16 %v567, %v566
        %v599 = vpack.c.bf16 %v569, %v568
        %v600 = vpack.c.bf16 %v571, %v570
        %v601 = vpack.c.bf16 %v573, %v572
        %v602 = vpack.c.bf16 %v575, %v574
        %v603 = vpack.c.bf16 %v577, %v576
        %v604 = vpack.c.bf16 %v579, %v578
        %v605 = vpack.c.bf16 %v581, %v580
        %v606 = vpack.c.bf16 %v583, %v582
        %v607 = vpack.c.bf16 %v585, %v584
        %v608 = vpack.c.bf16 %v587, %v586
        %v609 = vpack.c.bf16 %v589, %v588
        %v610 = vpack.c.bf16 %v591, %v590
        %v611 = vpack.c.bf16 %v593, %v592
        %v612 = vpack.c.bf16 %v595, %v594
        %v613 = vld [vmem:[%s4] sm:$0xff]
        %615 = vset.pattern.permute.xlu0 0
        %616 = vperm.xlu0 %615, %v613
        %v617 = vpop.permute.xlu0 %616
        %vm619 = vcmask 261120
        %v621 = vsel %vm619, %v596, 0
        %v624 = vsel %vm619, %v597, 0
        %v627 = vsel %vm619, %v598, 0
        %v630 = vsel %vm619, %v599, 0
        %v633 = vsel %vm619, %v600, 0
        %v636 = vsel %vm619, %v601, 0
        %v639 = vsel %vm619, %v602, 0
        %v642 = vsel %vm619, %v603, 0
        %v645 = vsel %vm619, %v604, 0
        %v648 = vsel %vm619, %v605, 0
        %v651 = vsel %vm619, %v606, 0
        %v654 = vsel %vm619, %v607, 0
        %v657 = vsel %vm619, %v608, 0
        %v660 = vsel %vm619, %v609, 0
        %v663 = vsel %vm619, %v610, 0
        %v666 = vsel %vm619, %v611, 0
        %v669 = vsel %vm619, %v612, 0
        %671 = vmatprep.subr.bf16.mxu0 0
        %672 = vmatpush1.bf16.xpose.msra.mxu0 %v624
        %673 = vmatprep.subr.bf16.mxu0 0
        %674 = vmatpush1.bf16.xpose.msra.mxu0 %v627
        %675 = vmatprep.subr.bf16.mxu0 0
        %676 = vmatpush1.bf16.xpose.msra.mxu0 %v630
        %677 = vmatprep.subr.bf16.mxu0 0
        %678 = vmatpush1.bf16.xpose.msra.mxu0 %v633
        %679 = vmatprep.subr.bf16.mxu0 0
        %680 = vmatpush1.bf16.xpose.msra.mxu0 %v636
        %681 = vmatprep.subr.bf16.mxu0 0
        %682 = vmatpush1.bf16.xpose.msra.mxu0 %v639
        %683 = vmatprep.subr.bf16.mxu0 0
        %684 = vmatpush1.bf16.xpose.msra.mxu0 %v642
        %685 = vmatprep.subr.bf16.mxu0 0
        %686 = vmatpush1.bf16.xpose.msra.mxu0 %v645
        %687 = vmatprep.subr.bf16.mxu0 0
        %688 = vmatpush1.bf16.xpose.msra.mxu0 %v648
        %689 = vmatprep.subr.bf16.mxu0 0
        %690 = vmatpush1.bf16.xpose.msra.mxu0 %v651
        %691 = vmatprep.subr.bf16.mxu0 0
        %692 = vmatpush1.bf16.xpose.msra.mxu0 %v654
        %693 = vmatprep.subr.bf16.mxu0 0
        %694 = vmatpush1.bf16.xpose.msra.mxu0 %v657
        %695 = vmatprep.subr.bf16.mxu0 0
        %696 = vmatpush1.bf16.xpose.msra.mxu0 %v660
        %697 = vmatprep.subr.bf16.mxu0 0
        %698 = vmatpush1.bf16.xpose.msra.mxu0 %v663
        %699 = vmatprep.subr.bf16.mxu0 0
        %700 = vmatpush1.bf16.xpose.msra.mxu0 %v666
        %701 = vmatprep.subr.bf16.mxu0 0
        %702 = vmatpush1.bf16.xpose.msra.mxu0 %v669
        %703 = vmatprep.mubr.bf16.mxu0 0
        %704 = vmatmul.mubr.bf16.gmra.mrb[0].mxu0 %v621
        %v705 = vpop.f32.mrb[0].mxu0
        %v706 = vadd.f32 %v617, %v705
        %v707 = vpop.f32.mrb[0].mxu0
        %v708 = vadd.f32 %v617, %v707
        %v709 = vpop.f32.mrb[0].mxu0
        %v710 = vpop.f32.mrb[0].mxu0
        %711 = vdwg.mxu0
        %712 = vst [vmem:[%s218] sm:$0xff] %v706
        %713 = vst [vmem:[%s218 + $0x8] sm:$0xff] %v708
        %s714 = sand.u32 %s137, 1
        %s715 = scalar_lea.sflag [#allocation3], %s714
        %s716 = sand.u32 %s137, 1
        %s717 = smul.addr %s716, 16
        %s718 = scalar_lea.vmem [#allocation2], %s717
        // Predicated region
        $region41: #{tpu_custom_call.1} parent=39 // pred_check
          %p719 = pneg %p147
        $region42: #{tpu_custom_call.1} parent=39 // pred_check_branch
          %721 = sbr.rel (%p719) target = $region44
        $region43: #{tpu_custom_call.1} parent=39 // pred_region
          %s722 = smul.u32 2, %s19
          %s724 = ssub.s32 256, 256
          %725 = vsyncadd %s715, %s724
          %s726 = smul.addr %s722, 128
          %s727 = scalar_lea.hbm %s5, %s726
          %s729 = sshll.u32 %s718, 4
          %s730 = int_to_ptr.vmem [resolvable:$true] %s729
          %732 = dma.vmem_to_hbm [thread:$0]  %s730, 256, %s727, %s715
        $region44: #{tpu_custom_call.1} parent=39 // pred_fallthru
          _
      $region40: #{tpu_custom_call.1} parent=5 // pred_fallthru
        _
      %p733 = scmp.le.s32.totalorder 2, %s14
      // Predicated region
      $region45: #{tpu_custom_call.1} parent=5 // pred_check
        %p734 = pneg %p733
      $region46: #{tpu_custom_call.1} parent=5 // pred_check_branch
        %736 = sbr.rel (%p734) target = $region48
      $region47: #{tpu_custom_call.1} parent=5 // pred_region
        %s737 = ssub.s32 %s14, 2
        // Predicated region
        $region49: #{tpu_custom_call.1} parent=47 // pred_check
          %p738 = pneg %p153
        $region50: #{tpu_custom_call.1} parent=47 // pred_check_branch
          %740 = sbr.rel (%p738) target = $region52
        $region51: #{tpu_custom_call.1} parent=47 // pred_region
          %s741 = sand.u32 %s138, 1
          %s742 = scalar_lea.sflag [#allocation3], %s741
          %s743 = sand.u32 %s138, 1
          %s744 = smul.addr %s743, 16
          %s745 = scalar_lea.vmem [#allocation2], %s744
          %746 = dma.done %s742, 256
        $region52: #{tpu_custom_call.1} parent=47 // pred_fallthru
          _
      $region48: #{tpu_custom_call.1} parent=5 // pred_fallthru
        _
    $region6: #{tpu_custom_call.1} parent=1 // loop_footer
      %s18 = sadd.s32 1, %s14
    $region7: #{tpu_custom_call.1} parent=1 // loop_footer_branch
      %13 = sbr.rel target = $region3
    $region8: #{tpu_custom_call.1} parent=1 // loop_exit
      _
    %747 = vsyncpa [#allocation3], 1
    %s748 = scalar_lea.sflag [#allocation3], 1
    %749 = vsyncpa %s748, 1

</llo_original>
